<compile_context>
chip_gen: v5e
topology: v5e:2x2
jax: 0.10.0
libtpu: 0.0.40
codegen_flags: <defaults>
</compile_context>

<pallas_src>
import functools

import jax
import jax.numpy as jnp
import numpy as np
from jax.experimental import pallas as pl
from jax.experimental.pallas import tpu as pltpu


def _round_up(x, m):
    return ((x + m - 1) // m) * m


def _rpl_loss_kernel(logits_ref, dist_ref, colsum_ref, tgt_ref,
                     out_ref, acc_ref,
                     *, batch, confidence, smoothing):
    TB, C = logits_ref.shape

    i = pl.program_id(1)
    nb = pl.num_programs(1)

    @pl.when(i == 0)
    def _init():
        acc_ref[...] = jnp.zeros_like(acc_ref)

    # Global (unclamped) batch-tile id and per-row validity mask.  Handles both
    # the ragged last tile (B % TB != 0) and the duplicated clamped tile that
    # the second core-split may see.
    bi = pl.program_id(0) * nb + i
    row = bi * TB + jax.lax.broadcasted_iota(jnp.int32, (TB, 1), 0)
    valid = row < batch                                               # (TB, 1)

    # Pre-mask logits so garbage rows in edge tiles can never produce NaN/Inf.
    # (All other reductions below are strictly per-row and discarded with
    #  jnp.where *selects*, so edge-row garbage never leaks into valid rows.)
    x = jnp.where(valid, logits_ref[...].astype(jnp.float32), 0.0)    # (TB, C)
    tgt = tgt_ref[...]                                                # (TB, 1)

    # ---- L_c partial: label-smoothed CE, no logprobs materialized ----------
    m = jnp.max(x, axis=-1, keepdims=True)
    lse = jnp.log(jnp.sum(jnp.exp(x - m), axis=-1, keepdims=True)) + m

    class_iota = jax.lax.broadcasted_iota(jnp.int32, (TB, C), 1)
    onehot = (class_iota == tgt).astype(jnp.float32)                  # (TB, C)
    tgt_logit = jnp.sum(x * onehot, axis=-1, keepdims=True)           # (TB, 1)
    mean_x = jnp.sum(x, axis=-1, keepdims=True) * (1.0 / C)           # (TB, 1)
    #   nll = lse - x[target];  smooth = lse - mean(x)
    per_sample = confidence * (lse - tgt_logit) + smoothing * (lse - mean_x)
    per_sample = jnp.where(valid, per_sample, 0.0)

    # ---- L_o partial: gather the pre-reduced per-class colsum of open_dist --
    gathered = jnp.sum(onehot * colsum_ref[...], axis=-1, keepdims=True)
    gathered = jnp.where(valid, gathered, 0.0)

    # ---- L_unknown partial: per-row min of dist_to_rp over unknown rows -----
    # Row-min in the NATIVE dtype (exact selection, bf16-safe); widen only the
    # (TB,1) result.
    min_b = jnp.min(dist_ref[...], axis=-1, keepdims=True).astype(jnp.float32)
    unk = jnp.logical_and(valid, tgt == 0)                            # (TB, 1)
    unk_min = jnp.where(unk, min_b, 0.0)
    unk_cnt = unk.astype(jnp.float32)

    # Pack the four per-row partials into lanes 0..3 of one (TB, 8) row block;
    # the cross-sublane reduction is deferred to the finalize step.
    lane = jax.lax.broadcasted_iota(jnp.int32, (TB, 8), 1)
    part = (jnp.where(lane == 0, per_sample, 0.0)
            + jnp.where(lane == 1, gathered, 0.0)
            + jnp.where(lane == 2, unk_min, 0.0)
            + jnp.where(lane == 3, unk_cnt, 0.0))
    acc_ref[...] += part

    @pl.when(i == nb - 1)
    def _finalize():
        out_ref[...] = jnp.sum(acc_ref[...], axis=0, keepdims=True)   # (1, 8)


def _chip_defaults():
    """Returns (default_core_splits, vmem_footprint_budget, vmem_limit_bytes)."""
    try:
        kind = jax.devices()[0].device_kind.lower()
    except Exception:
        kind = ""
    if any(t in kind for t in ("v5e", "v5 lite", "v6e", "v6 lite")):
        # Single-TensorCore chips: no core split. v5e has the smallest scoped
        # default (16 MiB) and lowest HBM BW, so keep the footprint modest.
        if "v5" in kind:
            return 1, 8 * 1024 * 1024, 32 * 1024 * 1024
        return 1, 12 * 1024 * 1024, 32 * 1024 * 1024
    if any(t in kind for t in ("v7", "v5p", "v4")):
        # 2 TensorCores per chip: split the batch; bigger blocks keep both TCs
        # at the HBM roofline (per-step fixed cost ~0.35us).
        return 2, 16 * 1024 * 1024, 32 * 1024 * 1024
    return 1, 8 * 1024 * 1024, 32 * 1024 * 1024


def _pick_tb(batch, *, c, cr, logits_itemsize, dist_itemsize, vmem_budget_bytes):
    # Lane-padded VMEM bytes per batch row: every block pads its last dim to a
    # multiple of 128 lanes, so small C / CR / the (TB,1) int32 target inflate
    # heavily vs. their raw HBM bytes.
    pad_c = _round_up(c, 128)
    pad_cr = _round_up(cr, 128)
    per_row = (2 * (pad_c * logits_itemsize           # logits block, 2x buffered
                    + pad_cr * dist_itemsize          # dist block,   2x buffered
                    + 128 * 4)                        # target block, 2x buffered
               + 128 * 4                              # (TB,8) f32 acc scratch
               + 3 * pad_c * 4)                       # in-body f32 temps (x, onehot, exp)
    tb = vmem_budget_bytes // max(int(per_row), 1)
    if tb >= batch:
        return batch                                  # single block covers the batch
    return max(8, (tb // 8) * 8)                      # (8,128) sublane rule


def min_unknown_rpl_loss_plus(logits, dist_to_rp, open_dist, target,
                              gamma=0.5, lambda_o=0.1, lambda_unknown=0.1,
                              smoothing=0.1, tb=None, n_core_splits=None):
    # `gamma` is unused in the PyTorch forward(); kept for signature parity.
    del gamma
    assert smoothing < 1.0
    B, C = logits.shape
    D0, C2, R = open_dist.shape
    assert C2 == C
    CR = C * R

    # Glue: no HBM-widening casts, no transposes.
    #   dist_to_rp -> contiguous (B, C*R) view (free reshape, native dtype)
    #   open_dist  -> per-class column sum (1, C) f32; the kernel only ever
    #                 needs this, so D0*C*R bytes never hit the kernel's DMA.
    dist_flat = dist_to_rp.reshape(B, CR)
    colsum = jnp.sum(open_dist, axis=(0, 2), dtype=jnp.float32).reshape(1, C)
    tgt2 = target.reshape(B, 1).astype(jnp.int32)

    auto_split = n_core_splits is None
    chip_splits, vmem_budget, vmem_limit = _chip_defaults()
    if auto_split:
        n_core_splits = chip_splits

    if tb is None:
        TB = _pick_tb(B, c=C, cr=CR,
                      logits_itemsize=logits.dtype.itemsize,
                      dist_itemsize=dist_flat.dtype.itemsize,
                      vmem_budget_bytes=vmem_budget)
    else:
        TB = tb
    assert TB == B or TB % 8 == 0, \
        "batch tile must be a multiple of 8 or the full batch"

    nt = pl.cdiv(B, TB)                                # total batch tiles
    n_split = min(max(int(n_core_splits), 1), nt)
    # On auto-detect, only split when each core gets >= 3 tiles; otherwise the
    # per-step fixed cost + duplicated clamped tail tile outweigh the split.
    if auto_split and n_split > 1 and nt < 3 * n_split:
        n_split = 1
    nb = pl.cdiv(nt, n_split)                          # tiles per core-split

    def bmap(p, i):
        # clamp the duplicated tail tile of the second split; the kernel masks
        # its rows out via the global row index.
        return (jnp.minimum(p * nb + i, nt - 1), 0)

    kernel = functools.partial(
        _rpl_loss_kernel,
        batch=B,
        confidence=float(1.0 - smoothing),
        smoothing=float(smoothing))

    grid_spec = pltpu.PrefetchScalarGridSpec(
        num_scalar_prefetch=0,
        grid=(n_split, nb),
        in_specs=[
            pl.BlockSpec((TB, C), bmap),                # logits
            pl.BlockSpec((TB, CR), bmap),               # dist_to_rp (flattened)
            pl.BlockSpec((1, C), lambda p, i: (0, 0)),  # open_dist colsum
            pl.BlockSpec((TB, 1), bmap),                # target
        ],
        out_specs=pl.BlockSpec((1, 8), lambda p, i: (p, 0)),
        scratch_shapes=[pltpu.VMEM((TB, 8), jnp.float32)],
    )

    cost = pl.CostEstimate(
        flops=int(10 * B * C + 3 * B * CR),
        transcendentals=int(B * C + B),
        bytes_accessed=int(B * C * logits.dtype.itemsize
                           + B * CR * dist_flat.dtype.itemsize
                           + B * 4 + C * 4 + n_split * 8 * 4))

    partials = pl.pallas_call(
        kernel,
        out_shape=jax.ShapeDtypeStruct((n_split, 8), jnp.float32),
        grid_spec=grid_spec,
        compiler_params=pltpu.CompilerParams(
            dimension_semantics=("parallel", "arbitrary"),
            vmem_limit_bytes=int(vmem_limit)),
        cost_estimate=cost,
    )(logits, dist_flat, colsum, tgt2)

    # Combine per-core partial sums (tiny scalar epilogue).
    parts = jnp.sum(partials, axis=0)                  # (8,)
    s_lc, s_lo, s_unk, n_unk = parts[0], parts[1], parts[2], parts[3]
    L_c = s_lc / float(B)
    L_o = s_lo / float(D0 * B * R)
    L_u = jnp.where(n_unk > 0.0, s_unk / jnp.maximum(n_unk, 1.0), 0.0)
    lo_term = lambda_o * L_o
    lu_term = lambda_unknown * L_u
    loss = L_c + lo_term + lu_term
    return loss, L_c, lo_term, lu_term


def _reference(logits, dist_to_rp, open_dist, target,
               lambda_o=0.1, lambda_unknown=0.1, smoothing=0.1):
    logits = logits.astype(jnp.float32)
    dist_to_rp = dist_to_rp.astype(jnp.float32)
    open_dist = open_dist.astype(jnp.float32)
    confidence = 1.0 - smoothing
    logprobs = jax.nn.log_softmax(logits, axis=-1)
    nll = -jnp.take_along_axis(logprobs, target[:, None], axis=-1)[:, 0]
    smooth = -logprobs.mean(axis=-1)
    L_c = (confidence * nll + smoothing * smooth).mean()
    L_o = open_dist[:, target, :].mean()
    d = dist_to_rp.reshape(dist_to_rp.shape[0], -1)
    mins = d.min(axis=1)
    mask = (target == 0).astype(jnp.float32)
    n = mask.sum()
    L_u = jnp.where(n > 0, (mins * mask).sum() / jnp.maximum(n, 1.0), 0.0)
    loss = L_c + lambda_o * L_o + lambda_unknown * L_u
    return loss, L_c, lambda_o * L_o, lambda_unknown * L_u


if __name__ == "__main__":
    B, C, R, D0 = 20, 10, 4, 6
    key = jax.random.PRNGKey(0)
    k1, k2, k3, k4 = jax.random.split(key, 4)

    logits = jax.random.normal(k1, (B, C), dtype=jnp.float32)
    dist_to_rp = jnp.abs(jax.random.normal(k2, (B, C, R), dtype=jnp.float32))
    open_dist = jnp.abs(jax.random.normal(k3, (D0, C, R), dtype=jnp.float32))
    target = jax.random.randint(k4, (B,), 0, C, dtype=jnp.int32)
    target = target.at[0].set(0)     # make sure the unknown branch is exercised

    refs = _reference(logits, dist_to_rp, open_dist, target)

    # Run 1: auto tile / auto split (single batch block, grid (1,1)).
    outs = min_unknown_rpl_loss_plus(logits, dist_to_rp, open_dist, target)
    outs = jax.block_until_ready(outs)
    for got, want in zip(outs, refs):
        np.testing.assert_allclose(np.asarray(got), np.asarray(want),
                                   rtol=1e-5, atol=1e-6)

    # Run 2: forced small tile + explicit 2-way split -> grid (2, 2); exercises
    # batch tiling, ragged last-tile masking, the clamped duplicate tile and
    # the core-split combine path.
    outs2 = min_unknown_rpl_loss_plus(logits, dist_to_rp, open_dist, target,
                                      tb=8, n_core_splits=2)
    outs2 = jax.block_until_ready(outs2)
    for got, want in zip(outs2, refs):
        np.testing.assert_allclose(np.asarray(got), np.asarray(want),
                                   rtol=1e-5, atol=1e-6)

    # Run 3: bf16 inputs shipped over HBM (dominant dist traffic halved),
    # widened only where needed inside the kernel; row-min stays in bf16.
    lb = logits.astype(jnp.bfloat16)
    db = dist_to_rp.astype(jnp.bfloat16)
    ob = open_dist.astype(jnp.bfloat16)
    outs3 = min_unknown_rpl_loss_plus(lb, db, ob, target, tb=8)
    outs3 = jax.block_until_ready(outs3)
    refs3 = _reference(lb, db, ob, target)
    for got, want in zip(outs3, refs3):
        np.testing.assert_allclose(np.asarray(got), np.asarray(want),
                                   rtol=2e-3, atol=2e-3)

    print("KERNEL_OK")
</pallas_src>

<mosaic_0001>
module attributes {stable_mosaic.version = 11 : i64} {
  func.func @_rpl_loss_kernel(%arg0: i32, %arg1: i32, %arg2: memref<20x10xf32, #tpu.memory_space<vmem>>, %arg3: memref<20x40xf32, #tpu.memory_space<vmem>>, %arg4: memref<1x10xf32, #tpu.memory_space<vmem>>, %arg5: memref<20x1xi32, #tpu.memory_space<vmem>>, %arg6: memref<1x8xf32, #tpu.memory_space<vmem>>, %arg7: memref<20x8xf32, #tpu.memory_space<vmem>>) attributes {dimension_semantics = [#tpu.dimension_semantics<parallel>, #tpu.dimension_semantics<arbitrary>], iteration_bounds = array<i64: 1, 1>, scalar_prefetch = 0 : i64, scratch_operands = 1 : i64, tpu.core_type = #tpu.core_type<tc>, window_params = [{transform_indices = @transform_0, window_bounds = array<i64: 20, 10>}, {transform_indices = @transform_1, window_bounds = array<i64: 20, 40>}, {pipeline_mode = #tpu.pipeline_mode<synchronous>, transform_indices = @transform_2, window_bounds = array<i64: 1, 10>}, {transform_indices = @transform_3, window_bounds = array<i64: 20, 1>}, {transform_indices = @transform_4, window_bounds = array<i64: 1, 8>}]} {
    %c0_i32 = arith.constant 0 : i32
    %0 = arith.cmpi eq, %arg1, %c0_i32 : i32
    %1 = arith.extui %0 : i1 to i32
    %c0_i32_0 = arith.constant 0 : i32
    %2 = arith.cmpi ne, %1, %c0_i32_0 : i32
    scf.if %2 {
      %cst_34 = arith.constant 0.000000e+00 : f32
      %98 = vector.broadcast %cst_34 : f32 to vector<20x8xf32>
      %c0_35 = arith.constant 0 : index
      %c0_36 = arith.constant 0 : index
      %99 = vector.load %arg7[%c0_35, %c0_36] : memref<20x8xf32, #tpu.memory_space<vmem>>, vector<20x8xf32>
      tpu.vector_store %arg7[%c0_35, %c0_36], %98 {strides = array<i32>} : memref<20x8xf32, #tpu.memory_space<vmem>>, vector<20x8xf32>,
    } else {
    }
    %c1_i32 = arith.constant 1 : i32
    %3 = arith.muli %arg0, %c1_i32 : i32
    %4 = arith.addi %3, %arg1 : i32
    %c20_i32 = arith.constant 20 : i32
    %5 = arith.muli %4, %c20_i32 : i32
    %6 = tpu.iota {dimensions = array<i32: 0>} : vector<20x1xi32>
    %7 = vector.broadcast %5 : i32 to vector<20x1xi32>
    %8 = arith.addi %7, %6 : vector<20x1xi32>
    %c20_i32_1 = arith.constant 20 : i32
    %9 = vector.broadcast %c20_i32_1 : i32 to vector<20x1xi32>
    %10 = arith.cmpi slt, %8, %9 : vector<20x1xi32>
    %c0 = arith.constant 0 : index
    %c0_2 = arith.constant 0 : index
    %11 = vector.load %arg2[%c0, %c0_2] : memref<20x10xf32, #tpu.memory_space<vmem>>, vector<20x10xf32>
    %cst = arith.constant 0.000000e+00 : f32
    %12 = vector.shape_cast %10 : vector<20x1xi1> to vector<20x1xi1>
    %13 = vector.broadcast %12 : vector<20x1xi1> to vector<20x10xi1>
    %14 = vector.broadcast %cst : f32 to vector<20x10xf32>
    %15 = arith.select %13, %11, %14 : vector<20x10xi1>, vector<20x10xf32>
    %c0_3 = arith.constant 0 : index
    %c0_4 = arith.constant 0 : index
    %16 = vector.load %arg5[%c0_3, %c0_4] : memref<20x1xi32, #tpu.memory_space<vmem>>, vector<20x1xi32>
    %cst_5 = arith.constant dense<0xFF800000> : vector<20xf32>
    %17 = vector.multi_reduction <maximumf>, %15, %cst_5 [1] : vector<20x10xf32> to vector<20xf32>
    %18 = vector.shape_cast %17 : vector<20xf32> to vector<20x1xf32>
    %19 = vector.broadcast %18 : vector<20x1xf32> to vector<20x10xf32>
    %20 = arith.subf %15, %19 : vector<20x10xf32>
    %21 = math.exp %20 : vector<20x10xf32>
    %cst_6 = arith.constant dense<0.000000e+00> : vector<20xf32>
    %22 = vector.multi_reduction <add>, %21, %cst_6 [1] : vector<20x10xf32> to vector<20xf32>
    %23 = vector.shape_cast %22 : vector<20xf32> to vector<20x1xf32>
    %24 = math.log %23 : vector<20x1xf32>
    %25 = arith.addf %24, %18 : vector<20x1xf32>
    %26 = tpu.iota {dimensions = array<i32: 1>} : vector<20x10xi32>
    %27 = vector.broadcast %16 : vector<20x1xi32> to vector<20x10xi32>
    %28 = arith.cmpi eq, %26, %27 : vector<20x10xi32>
    %29 = arith.extui %28 : vector<20x10xi1> to vector<20x10xi32>
    %30 = arith.sitofp %29 : vector<20x10xi32> to vector<20x10xf32>
    %31 = arith.mulf %15, %30 : vector<20x10xf32>
    %cst_7 = arith.constant dense<0.000000e+00> : vector<20xf32>
    %32 = vector.multi_reduction <add>, %31, %cst_7 [1] : vector<20x10xf32> to vector<20xf32>
    %33 = vector.shape_cast %32 : vector<20xf32> to vector<20x1xf32>
    %cst_8 = arith.constant dense<0.000000e+00> : vector<20xf32>
    %34 = vector.multi_reduction <add>, %15, %cst_8 [1] : vector<20x10xf32> to vector<20xf32>
    %35 = vector.shape_cast %34 : vector<20xf32> to vector<20x1xf32>
    %cst_9 = arith.constant 1.000000e-01 : f32
    %36 = vector.broadcast %cst_9 : f32 to vector<20x1xf32>
    %37 = arith.mulf %35, %36 : vector<20x1xf32>
    %38 = arith.subf %25, %33 : vector<20x1xf32>
    %cst_10 = arith.constant 0.899999976 : f32
    %39 = vector.broadcast %cst_10 : f32 to vector<20x1xf32>
    %40 = arith.mulf %39, %38 : vector<20x1xf32>
    %41 = arith.subf %25, %37 : vector<20x1xf32>
    %cst_11 = arith.constant 1.000000e-01 : f32
    %42 = vector.broadcast %cst_11 : f32 to vector<20x1xf32>
    %43 = arith.mulf %42, %41 : vector<20x1xf32>
    %44 = arith.addf %40, %43 : vector<20x1xf32>
    %cst_12 = arith.constant 0.000000e+00 : f32
    %45 = vector.broadcast %cst_12 : f32 to vector<20x1xf32>
    %46 = arith.select %10, %44, %45 : vector<20x1xi1>, vector<20x1xf32>
    %c0_13 = arith.constant 0 : index
    %c0_14 = arith.constant 0 : index
    %47 = vector.load %arg4[%c0_13, %c0_14] : memref<1x10xf32, #tpu.memory_space<vmem>>, vector<1x10xf32>
    %48 = vector.broadcast %47 : vector<1x10xf32> to vector<20x10xf32>
    %49 = arith.mulf %30, %48 : vector<20x10xf32>
    %cst_15 = arith.constant dense<0.000000e+00> : vector<20xf32>
    %50 = vector.multi_reduction <add>, %49, %cst_15 [1] : vector<20x10xf32> to vector<20xf32>
    %51 = vector.shape_cast %50 : vector<20xf32> to vector<20x1xf32>
    %cst_16 = arith.constant 0.000000e+00 : f32
    %52 = vector.broadcast %cst_16 : f32 to vector<20x1xf32>
    %53 = arith.select %10, %51, %52 : vector<20x1xi1>, vector<20x1xf32>
    %c0_17 = arith.constant 0 : index
    %c0_18 = arith.constant 0 : index
    %54 = vector.load %arg3[%c0_17, %c0_18] : memref<20x40xf32, #tpu.memory_space<vmem>>, vector<20x40xf32>
    %cst_19 = arith.constant dense<0x7F800000> : vector<20xf32>
    %55 = vector.multi_reduction <minimumf>, %54, %cst_19 [1] : vector<20x40xf32> to vector<20xf32>
    %56 = vector.shape_cast %55 : vector<20xf32> to vector<20x1xf32>
    %c0_i32_20 = arith.constant 0 : i32
    %57 = vector.broadcast %c0_i32_20 : i32 to vector<20x1xi32>
    %58 = arith.cmpi eq, %16, %57 : vector<20x1xi32>
    %59 = arith.andi %10, %58 : vector<20x1xi1>
    %cst_21 = arith.constant 0.000000e+00 : f32
    %60 = vector.broadcast %cst_21 : f32 to vector<20x1xf32>
    %61 = arith.select %59, %56, %60 : vector<20x1xi1>, vector<20x1xf32>
    %62 = arith.extui %59 : vector<20x1xi1> to vector<20x1xi32>
    %63 = arith.sitofp %62 : vector<20x1xi32> to vector<20x1xf32>
    %64 = tpu.iota {dimensions = array<i32: 1>} : vector<20x8xi32>
    %c0_i32_22 = arith.constant 0 : i32
    %65 = vector.broadcast %c0_i32_22 : i32 to vector<20x8xi32>
    %66 = arith.cmpi eq, %64, %65 : vector<20x8xi32>
    %cst_23 = arith.constant 0.000000e+00 : f32
    %67 = vector.shape_cast %46 : vector<20x1xf32> to vector<20x1xf32>
    %68 = vector.broadcast %67 : vector<20x1xf32> to vector<20x8xf32>
    %69 = vector.broadcast %cst_23 : f32 to vector<20x8xf32>
    %70 = arith.select %66, %68, %69 : vector<20x8xi1>, vector<20x8xf32>
    %c1_i32_24 = arith.constant 1 : i32
    %71 = vector.broadcast %c1_i32_24 : i32 to vector<20x8xi32>
    %72 = arith.cmpi eq, %64, %71 : vector<20x8xi32>
    %cst_25 = arith.constant 0.000000e+00 : f32
    %73 = vector.shape_cast %53 : vector<20x1xf32> to vector<20x1xf32>
    %74 = vector.broadcast %73 : vector<20x1xf32> to vector<20x8xf32>
    %75 = vector.broadcast %cst_25 : f32 to vector<20x8xf32>
    %76 = arith.select %72, %74, %75 : vector<20x8xi1>, vector<20x8xf32>
    %77 = arith.addf %70, %76 : vector<20x8xf32>
    %c2_i32 = arith.constant 2 : i32
    %78 = vector.broadcast %c2_i32 : i32 to vector<20x8xi32>
    %79 = arith.cmpi eq, %64, %78 : vector<20x8xi32>
    %cst_26 = arith.constant 0.000000e+00 : f32
    %80 = vector.shape_cast %61 : vector<20x1xf32> to vector<20x1xf32>
    %81 = vector.broadcast %80 : vector<20x1xf32> to vector<20x8xf32>
    %82 = vector.broadcast %cst_26 : f32 to vector<20x8xf32>
    %83 = arith.select %79, %81, %82 : vector<20x8xi1>, vector<20x8xf32>
    %84 = arith.addf %77, %83 : vector<20x8xf32>
    %c3_i32 = arith.constant 3 : i32
    %85 = vector.broadcast %c3_i32 : i32 to vector<20x8xi32>
    %86 = arith.cmpi eq, %64, %85 : vector<20x8xi32>
    %cst_27 = arith.constant 0.000000e+00 : f32
    %87 = vector.shape_cast %63 : vector<20x1xf32> to vector<20x1xf32>
    %88 = vector.broadcast %87 : vector<20x1xf32> to vector<20x8xf32>
    %89 = vector.broadcast %cst_27 : f32 to vector<20x8xf32>
    %90 = arith.select %86, %88, %89 : vector<20x8xi1>, vector<20x8xf32>
    %91 = arith.addf %84, %90 : vector<20x8xf32>
    %c0_28 = arith.constant 0 : index
    %c0_29 = arith.constant 0 : index
    %92 = vector.load %arg7[%c0_28, %c0_29] : memref<20x8xf32, #tpu.memory_space<vmem>>, vector<20x8xf32>
    %93 = arith.addf %92, %91 : vector<20x8xf32>
    %c0_30 = arith.constant 0 : index
    %c0_31 = arith.constant 0 : index
    %94 = vector.load %arg7[%c0_30, %c0_31] : memref<20x8xf32, #tpu.memory_space<vmem>>, vector<20x8xf32>
    tpu.vector_store %arg7[%c0_30, %c0_31], %93 {strides = array<i32>} : memref<20x8xf32, #tpu.memory_space<vmem>>, vector<20x8xf32>,
    %c0_i32_32 = arith.constant 0 : i32
    %95 = arith.cmpi eq, %arg1, %c0_i32_32 : i32
    %96 = arith.extui %95 : i1 to i32
    %c0_i32_33 = arith.constant 0 : i32
    %97 = arith.cmpi ne, %96, %c0_i32_33 : i32
    scf.if %97 {
      %c0_34 = arith.constant 0 : index
      %c0_35 = arith.constant 0 : index
      %98 = vector.load %arg7[%c0_34, %c0_35] : memref<20x8xf32, #tpu.memory_space<vmem>>, vector<20x8xf32>
      %cst_36 = arith.constant dense<0.000000e+00> : vector<8xf32>
      %99 = vector.multi_reduction <add>, %98, %cst_36 [0] : vector<20x8xf32> to vector<8xf32>
      %100 = vector.shape_cast %99 : vector<8xf32> to vector<1x8xf32>
      %c0_37 = arith.constant 0 : index
      %c0_38 = arith.constant 0 : index
      %101 = vector.load %arg6[%c0_37, %c0_38] : memref<1x8xf32, #tpu.memory_space<vmem>>, vector<1x8xf32>
      tpu.vector_store %arg6[%c0_37, %c0_38], %100 {strides = array<i32>} : memref<1x8xf32, #tpu.memory_space<vmem>>, vector<1x8xf32>,
    } else {
    }
    return
  }
  func.func @transform_0(%arg0: i32, %arg1: i32) -> (i32, i32) {
    %c1_i32 = arith.constant 1 : i32
    %0 = arith.muli %arg0, %c1_i32 : i32
    %1 = arith.addi %0, %arg1 : i32
    %c0_i32 = arith.constant 0 : i32
    %2 = arith.minsi %1, %c0_i32 : i32
    %c0_i32_0 = arith.constant 0 : i32
    %c0_i32_1 = arith.constant 0 : i32
    return %2, %c0_i32_0 : i32, i32
  }
  func.func @transform_1(%arg0: i32, %arg1: i32) -> (i32, i32) {
    %c1_i32 = arith.constant 1 : i32
    %0 = arith.muli %arg0, %c1_i32 : i32
    %1 = arith.addi %0, %arg1 : i32
    %c0_i32 = arith.constant 0 : i32
    %2 = arith.minsi %1, %c0_i32 : i32
    %c0_i32_0 = arith.constant 0 : i32
    %c0_i32_1 = arith.constant 0 : i32
    return %2, %c0_i32_0 : i32, i32
  }
  func.func @transform_2(%arg0: i32, %arg1: i32) -> (i32, i32) {
    %c0_i32 = arith.constant 0 : i32
    %c0_i32_0 = arith.constant 0 : i32
    %c0_i32_1 = arith.constant 0 : i32
    return %c0_i32, %c0_i32_0 : i32, i32
  }
  func.func @transform_3(%arg0: i32, %arg1: i32) -> (i32, i32) {
    %c1_i32 = arith.constant 1 : i32
    %0 = arith.muli %arg0, %c1_i32 : i32
    %1 = arith.addi %0, %arg1 : i32
    %c0_i32 = arith.constant 0 : i32
    %2 = arith.minsi %1, %c0_i32 : i32
    %c0_i32_0 = arith.constant 0 : i32
    %c0_i32_1 = arith.constant 0 : i32
    return %2, %c0_i32_0 : i32, i32
  }
  func.func @transform_4(%arg0: i32, %arg1: i32) -> (i32, i32) {
    %c0_i32 = arith.constant 0 : i32
    %c0_i32_0 = arith.constant 0 : i32
    return %arg0, %c0_i32 : i32, i32
  }
}

</mosaic_0001>

<llo_original>
// kernel: tpu_custom_call.1
$region0: #{tpu_custom_call.1}
  #allocation0 [shape = 'u32[]', space=smem, size = 0x4, offset = 0x4, fixed_abs, tag = 'smem constant byte address 0x4 - core index']
  #allocation1 [shape = 'u32[72,128]{1,0:T(1,128)}', space=vmem, size = 0x9000, scoped, tag = 'internal scratch']
  #allocation2 [shape = 'f32[20,8]{1,0:T(8,128)}', space=vmem, size = 0x3000, scoped, tag = 'scratch operand']
  %s0 = inlined_call_operand.vmem [shape: f32[20,10], index: 0, kind: input, shape index: {}]
  %s1 = inlined_call_operand.vmem [shape: f32[20,40], index: 1, kind: input, shape index: {}]
  %s2 = inlined_call_operand.vmem [shape: f32[1,10], index: 2, kind: input, shape index: {}]
  %s3 = inlined_call_operand.vmem [shape: s32[20,1], index: 3, kind: input, shape index: {}]
  %s4 = inlined_call_operand.hbm [shape: f32[1,8], index: 4, kind: output, shape index: {}]
  %s5 = sld [smem:[#allocation0]]
  $region34: #{tpu_custom_call.1} parent=0
    _
  %s7 = ssub.s32 1, %s5
  %s8 = scalar_select 0, %s7, %s5
  $region1: #{tpu_custom_call.1} parent=0
    #allocation3 [shape = 'u8[512]{0}', space=vmem, size = 0x400, scoped, tag = 'output window, operand 0, single buffered']
    #allocation4 [shape = 's32[1]{0}', space=sflag, size = 0x4, scoped, tag = 'scoped memory for tpu_custom_call.1']
    %9 = vsyncpa [#allocation4], 0
    // Predicated region
    $region2: #{tpu_custom_call.1} parent=1 // pred_check
      _
    $region3: #{tpu_custom_call.1} parent=1 // pred_check_branch
      %11 = sbr.rel (0) target = $region5
    $region4: #{tpu_custom_call.1} parent=1 // pred_region
      %s12 = sadd.s32 0, 0
      %p13 = scmp.lt.s32.totalorder %s12, 0
      %s14 = scalar_select %p13, %s12, 0
      %s15 = smul.u32 3, %s14
      %p16 = scmp.lt.s32.totalorder %s15, 2
      %s17 = scalar_select %p16, %s15, 2
      %s18 = smul.addr %s17, 8
      %s19 = scalar_lea.vmem %s0, %s18
      %s20 = sadd.s32 0, 0
      %p21 = scmp.lt.s32.totalorder %s20, 0
      %s22 = scalar_select %p21, %s20, 0
      %s23 = smul.u32 3, %s22
    $region5: #{tpu_custom_call.1} parent=1 // pred_fallthru
      _
    // Predicated region
    $region6: #{tpu_custom_call.1} parent=1 // pred_check
      _
    $region7: #{tpu_custom_call.1} parent=1 // pred_check_branch
      %25 = sbr.rel (0) target = $region9
    $region8: #{tpu_custom_call.1} parent=1 // pred_region
      %s26 = sadd.s32 0, 0
      %p27 = scmp.lt.s32.totalorder %s26, 0
      %s28 = scalar_select %p27, %s26, 0
      %s29 = smul.u32 3, %s28
      %p30 = scmp.lt.s32.totalorder %s29, 2
      %s31 = scalar_select %p30, %s29, 2
      %s32 = smul.addr %s31, 8
      %s33 = scalar_lea.vmem %s1, %s32
      %s34 = sadd.s32 0, 0
      %p35 = scmp.lt.s32.totalorder %s34, 0
      %s36 = scalar_select %p35, %s34, 0
      %s37 = smul.u32 3, %s36
    $region9: #{tpu_custom_call.1} parent=1 // pred_fallthru
      _
    // Predicated region
    $region10: #{tpu_custom_call.1} parent=1 // pred_check
      _
    $region11: #{tpu_custom_call.1} parent=1 // pred_check_branch
      %39 = sbr.rel (0) target = $region13
    $region12: #{tpu_custom_call.1} parent=1 // pred_region
      _
    $region13: #{tpu_custom_call.1} parent=1 // pred_fallthru
      _
    // Predicated region
    $region14: #{tpu_custom_call.1} parent=1 // pred_check
      _
    $region15: #{tpu_custom_call.1} parent=1 // pred_check_branch
      %41 = sbr.rel (0) target = $region17
    $region16: #{tpu_custom_call.1} parent=1 // pred_region
      %s42 = sadd.s32 0, 0
      %p43 = scmp.lt.s32.totalorder %s42, 0
      %s44 = scalar_select %p43, %s42, 0
      %s45 = smul.u32 3, %s44
      %p46 = scmp.lt.s32.totalorder %s45, 2
      %s47 = scalar_select %p46, %s45, 2
      %s48 = smul.addr %s47, 8
      %s49 = scalar_lea.vmem %s3, %s48
      %s50 = sadd.s32 0, 0
      %p51 = scmp.lt.s32.totalorder %s50, 0
      %s52 = scalar_select %p51, %s50, 0
      %s53 = smul.u32 3, %s52
    $region17: #{tpu_custom_call.1} parent=1 // pred_fallthru
      _
    %s54 = sadd.s32 0, 0
    %p55 = scmp.lt.s32.totalorder %s54, 0
    %s56 = scalar_select %p55, %s54, 0
    %s57 = smul.u32 3, %s56
    %p58 = scmp.lt.s32.totalorder %s57, 2
    %s59 = scalar_select %p58, %s57, 2
    %s60 = smul.addr %s59, 8
    %s61 = scalar_lea.vmem %s0, %s60
    %s62 = sadd.s32 0, 0
    %p63 = scmp.lt.s32.totalorder %s62, 0
    %s64 = scalar_select %p63, %s62, 0
    %s65 = smul.u32 3, %s64
    %p66 = scmp.lt.s32.totalorder %s65, 2
    %s67 = scalar_select %p66, %s65, 2
    %s68 = smul.addr %s67, 8
    %s69 = scalar_lea.vmem %s1, %s68
    %s70 = sadd.s32 0, 0
    %p71 = scmp.lt.s32.totalorder %s70, 0
    %s72 = scalar_select %p71, %s70, 0
    %s73 = smul.u32 3, %s72
    %p74 = scmp.lt.s32.totalorder %s73, 2
    %s75 = scalar_select %p74, %s73, 2
    %s76 = smul.addr %s75, 8
    %s77 = scalar_lea.vmem %s3, %s76
    %s78 = sadd.s32 0, 0
    %p79 = scmp.lt.s32.totalorder %s78, 0
    %s80 = scalar_select %p79, %s78, 0
    %s81 = smul.u32 3, %s80
    %p82 = scmp.lt.s32.totalorder %s81, 2
    %s83 = scalar_select %p82, %s81, 2
    %s84 = smul.addr %s83, 8
    %s85 = scalar_lea.vmem %s0, %s84
    %s86 = sadd.s32 0, 0
    %p87 = scmp.lt.s32.totalorder %s86, 0
    %s88 = scalar_select %p87, %s86, 0
    %s89 = smul.u32 3, %s88
    %s90 = sadd.s32 0, 0
    %p91 = scmp.lt.s32.totalorder %s90, 0
    %s92 = scalar_select %p91, %s90, 0
    %s93 = smul.u32 3, %s92
    %p94 = scmp.lt.s32.totalorder %s93, 2
    %s95 = scalar_select %p94, %s93, 2
    %s96 = smul.addr %s95, 8
    %s97 = scalar_lea.vmem %s1, %s96
    %s98 = sadd.s32 0, 0
    %p99 = scmp.lt.s32.totalorder %s98, 0
    %s100 = scalar_select %p99, %s98, 0
    %s101 = smul.u32 3, %s100
    %s102 = sadd.s32 0, 0
    %p103 = scmp.lt.s32.totalorder %s102, 0
    %s104 = scalar_select %p103, %s102, 0
    %s105 = smul.u32 3, %s104
    %p106 = scmp.lt.s32.totalorder %s105, 2
    %s107 = scalar_select %p106, %s105, 2
    %s108 = smul.addr %s107, 8
    %s109 = scalar_lea.vmem %s3, %s108
    %s110 = sadd.s32 0, 0
    %p111 = scmp.lt.s32.totalorder %s110, 0
    %s112 = scalar_select %p111, %s110, 0
    %s113 = smul.u32 3, %s112
    %p114 = scmp.eq.s32.totalorder 0, 0
    // Predicated region
    $region18: #{tpu_custom_call.1} parent=1 // pred_check
      %p115 = pneg %p114
    $region19: #{tpu_custom_call.1} parent=1 // pred_check_branch
      %117 = sbr.rel (%p115) target = $region21
    $region20: #{tpu_custom_call.1} parent=1 // pred_region
      %vm118 = vcmask 64512
      %119 = vst.msk [vmem:[#allocation2] sm:$0xff] %vm118, 0.0
      %120 = vst.msk [vmem:[#allocation2 + $0x8] sm:$0xff] %vm118, 0.0
      %vm121 = vcmask 60416
      %122 = vst.msk [vmem:[#allocation2 + $0x10] sm:$0xf] %vm121, 0.0
    $region21: #{tpu_custom_call.1} parent=1 // pred_fallthru
      _
    %s123 = sadd.s32 0, 0
    %s124 = smul.u32 %s123, 20
    %v125 = vlaneseq
    %v126 = vshrl.u32 %v125, 7
    %v127 = vadd.s32 %v126, 8
    %v128 = vadd.s32 %v126, 16
    %v129 = vstv %s124
    %v130 = vadd.s32 %v129, %v126
    %v131 = vadd.s32 %v129, %v127
    %v132 = vadd.s32 %v129, %v128
    %vm133 = vcmp.lt.s32.totalorder %v130, 20
    %vm134 = vcmp.lt.s32.totalorder %v131, 20
    %vm135 = vcmp.lt.s32.totalorder %v132, 20
    %v136 = vld [vmem:[%s85] sm:$0xff]
    %v137 = vld [vmem:[%s85 + $0x8] sm:$0xff]
    %v138 = vld [vmem:[%s85 + $0x10] sm:$0xf]
    %v139 = vsel %vm133, 1, 0
    %v140 = vsel %vm134, 1, 0
    %v141 = vsel %vm135, 1, 0
    %vm142 = vcmp.eq.s32.totalorder %v139, 1
    %vm143 = vcmp.eq.s32.totalorder %v140, 1
    %vm144 = vcmp.eq.s32.totalorder %v141, 1
    %v145 = vsel %vm142, %v136, 0.0
    %v146 = vsel %vm143, %v137, 0.0
    %v147 = vsel %vm144, %v138, 0.0
    %v148 = vld [vmem:[%s109] sm:$0xff]
    %v149 = vld [vmem:[%s109 + $0x8] sm:$0xff]
    %v150 = vld [vmem:[%s109 + $0x10] sm:$0xf]
    %vm151 = vcmask 80896
    %v152 = vsel %vm151, %v145, -inf
    %153 = vmax.xlane.f32.xlu0 %v152
    %v154 = vpop.xlane.xlu0 %153
    %v155 = vsel %vm151, %v146, -inf
    %156 = vmax.xlane.f32.xlu0 %v155
    %v157 = vpop.xlane.xlu0 %156
    %vm158 = vcmask 76800
    %v159 = vsel %vm158, %v147, -inf
    %160 = vmax.xlane.f32.xlu0 %v159
    %v161 = vpop.xlane.xlu0 %160
    %v162 = vsub.f32 %v145, %v154
    %v163 = vsub.f32 %v146, %v157
    %v164 = vsub.f32 %v147, %v161
    %v165 = vmul.f32 %v162, 1.442695
    %v166 = vpow.pop %v165
    %v167 = vmul.f32 %v163, 1.442695
    %v168 = vpow.pop %v167
    %v169 = vmul.f32 %v164, 1.442695
    %v170 = vpow.pop %v169
    %v171 = vsel %vm151, %v166, 0.0
    %172 = vadd.xlane.f32.xlu0 %v171
    %v173 = vpop.xlane.xlu0 %172
    %v174 = vsel %vm151, %v168, 0.0
    %175 = vadd.xlane.f32.xlu0 %v174
    %v176 = vpop.xlane.xlu0 %175
    %v177 = vsel %vm158, %v170, 0.0
    %178 = vadd.xlane.f32.xlu0 %v177
    %v179 = vpop.xlane.xlu0 %178
    %v180 = vlog2.pop %v173
    %v181 = vmul.f32 %v180, 0.6931472
    %v182 = vlog2.pop %v176
    %v183 = vmul.f32 %v182, 0.6931472
    %v184 = vlog2.pop %v179
    %v185 = vmul.f32 %v184, 0.6931472
    %v186 = vadd.f32 %v181, %v154
    %v187 = vadd.f32 %v183, %v157
    %v188 = vadd.f32 %v185, %v161
    %v189 = vlaneseq
    %v190 = vand.u32 %v189, 127
    %191 = vset.pattern.permute.xlu0 0
    %192 = vperm.xlu0 %191, %v148
    %v193 = vpop.permute.xlu0 %192
    %194 = vset.pattern.permute.xlu0 0
    %195 = vperm.xlu0 %194, %v149
    %v196 = vpop.permute.xlu0 %195
    %197 = vset.pattern.permute.xlu0 0
    %198 = vperm.xlu0 %197, %v150
    %v199 = vpop.permute.xlu0 %198
    %vm200 = vcmp.eq.s32.totalorder %v190, %v193
    %vm201 = vcmp.eq.s32.totalorder %v190, %v196
    %vm202 = vcmp.eq.s32.totalorder %v190, %v199
    %v203 = vsel %vm200, 1, 0
    %v204 = vsel %vm201, 1, 0
    %v205 = vsel %vm202, 1, 0
    %v206 = vcvt.s32.f32 %v203
    %v207 = vcvt.s32.f32 %v204
    %v208 = vcvt.s32.f32 %v205
    %v209 = vmul.f32 %v145, %v206
    %v210 = vmul.f32 %v146, %v207
    %v211 = vmul.f32 %v147, %v208
    %v212 = vsel %vm151, %v209, 0.0
    %213 = vadd.xlane.f32.xlu0 %v212
    %v214 = vpop.xlane.xlu0 %213
    %v215 = vsel %vm151, %v210, 0.0
    %216 = vadd.xlane.f32.xlu0 %v215
    %v217 = vpop.xlane.xlu0 %216
    %v218 = vsel %vm158, %v211, 0.0
    %219 = vadd.xlane.f32.xlu0 %v218
    %v220 = vpop.xlane.xlu0 %219
    %v221 = vsel %vm151, %v145, 0.0
    %222 = vadd.xlane.f32.xlu0 %v221
    %v223 = vpop.xlane.xlu0 %222
    %v224 = vsel %vm151, %v146, 0.0
    %225 = vadd.xlane.f32.xlu0 %v224
    %v226 = vpop.xlane.xlu0 %225
    %v227 = vsel %vm158, %v147, 0.0
    %228 = vadd.xlane.f32.xlu0 %v227
    %v229 = vpop.xlane.xlu0 %228
    %v230 = vmul.f32 %v223, 0.1
    %v231 = vmul.f32 %v226, 0.1
    %v232 = vmul.f32 %v229, 0.1
    %v233 = vsub.f32 %v186, %v214
    %v234 = vsub.f32 %v187, %v217
    %v235 = vsub.f32 %v188, %v220
    %v236 = vmul.f32 %v233, 0.9
    %v237 = vmul.f32 %v234, 0.9
    %v238 = vmul.f32 %v235, 0.9
    %v239 = vsub.f32 %v186, %v230
    %v240 = vsub.f32 %v187, %v231
    %v241 = vsub.f32 %v188, %v232
    %v242 = vmul.f32 %v239, 0.1
    %v243 = vmul.f32 %v240, 0.1
    %v244 = vmul.f32 %v241, 0.1
    %v245 = vadd.f32 %v236, %v242
    %v246 = vadd.f32 %v237, %v243
    %v247 = vadd.f32 %v238, %v244
    %v248 = vsel %vm133, %v245, 0.0
    %v249 = vsel %vm134, %v246, 0.0
    %v250 = vsel %vm135, %v247, 0.0
    %v251 = vld [vmem:[%s2] sm:$0x1]
    %v253 = vperm.slane %v251, 0
    %v255 = vmul.f32 %v206, %v253
    %v256 = vmul.f32 %v207, %v253
    %v257 = vmul.f32 %v208, %v253
    %v258 = vsel %vm151, %v255, 0.0
    %259 = vadd.xlane.f32.xlu0 %v258
    %v260 = vpop.xlane.xlu0 %259
    %v261 = vsel %vm151, %v256, 0.0
    %262 = vadd.xlane.f32.xlu0 %v261
    %v263 = vpop.xlane.xlu0 %262
    %v264 = vsel %vm158, %v257, 0.0
    %265 = vadd.xlane.f32.xlu0 %v264
    %v266 = vpop.xlane.xlu0 %265
    %v267 = vsel %vm133, %v260, 0.0
    %v268 = vsel %vm134, %v263, 0.0
    %v269 = vsel %vm135, %v266, 0.0
    %v270 = vld [vmem:[%s97] sm:$0xff]
    %v271 = vld [vmem:[%s97 + $0x8] sm:$0xff]
    %v272 = vld [vmem:[%s97 + $0x10] sm:$0xf]
    %vm273 = vcmask 326656
    %v274 = vsel %vm273, %v270, inf
    %275 = vmin.xlane.f32.xlu0 %v274
    %v276 = vpop.xlane.xlu0 %275
    %v277 = vsel %vm273, %v271, inf
    %278 = vmin.xlane.f32.xlu0 %v277
    %v279 = vpop.xlane.xlu0 %278
    %vm280 = vcmask 322560
    %v281 = vsel %vm280, %v272, inf
    %282 = vmin.xlane.f32.xlu0 %v281
    %v283 = vpop.xlane.xlu0 %282
    %vm284 = vcmp.eq.s32.totalorder %v148, 0
    %vm285 = vcmp.eq.s32.totalorder %v149, 0
    %vm286 = vcmp.eq.s32.totalorder %v150, 0
    %vm287 = vmand %vm133, %vm284
    %vm288 = vmand %vm134, %vm285
    %vm289 = vmand %vm135, %vm286
    %v290 = vsel %vm287, %v276, 0.0
    %v291 = vsel %vm288, %v279, 0.0
    %v292 = vsel %vm289, %v283, 0.0
    %v293 = vsel %vm287, 1, 0
    %v294 = vsel %vm288, 1, 0
    %v295 = vsel %vm289, 1, 0
    %v296 = vcvt.s32.f32 %v293
    %v297 = vcvt.s32.f32 %v294
    %v298 = vcvt.s32.f32 %v295
    %vm299 = vcmp.eq.s32.totalorder %v190, 0
    %v300 = vsel %vm299, %v248, 0.0
    %v301 = vsel %vm299, %v249, 0.0
    %v302 = vsel %vm299, %v250, 0.0
    %vm303 = vcmp.eq.s32.totalorder %v190, 1
    %v304 = vsel %vm303, %v267, 0.0
    %v305 = vsel %vm303, %v268, 0.0
    %v306 = vsel %vm303, %v269, 0.0
    %v307 = vadd.f32 %v300, %v304
    %v308 = vadd.f32 %v301, %v305
    %v309 = vadd.f32 %v302, %v306
    %vm310 = vcmp.eq.s32.totalorder %v190, 2
    %312 = vset.pattern.permute.xlu0 0
    %313 = vperm.xlu0 %312, %v290
    %v314 = vpop.permute.xlu0 %313
    %317 = vset.pattern.permute.xlu0 0
    %318 = vperm.xlu0 %317, %v291
    %v319 = vpop.permute.xlu0 %318
    %322 = vset.pattern.permute.xlu0 0
    %323 = vperm.xlu0 %322, %v292
    %v324 = vpop.permute.xlu0 %323
    %v326 = vsel %vm310, %v314, 0.0
    %v327 = vsel %vm310, %v319, 0.0
    %v328 = vsel %vm310, %v324, 0.0
    %v329 = vadd.f32 %v307, %v326
    %v330 = vadd.f32 %v308, %v327
    %v331 = vadd.f32 %v309, %v328
    %vm332 = vcmp.eq.s32.totalorder %v190, 3
    %334 = vset.pattern.permute.xlu0 0
    %335 = vperm.xlu0 %334, %v296
    %v336 = vpop.permute.xlu0 %335
    %339 = vset.pattern.permute.xlu0 0
    %340 = vperm.xlu0 %339, %v297
    %v341 = vpop.permute.xlu0 %340
    %344 = vset.pattern.permute.xlu0 0
    %345 = vperm.xlu0 %344, %v298
    %v346 = vpop.permute.xlu0 %345
    %v348 = vsel %vm332, %v336, 0.0
    %v349 = vsel %vm332, %v341, 0.0
    %v350 = vsel %vm332, %v346, 0.0
    %v351 = vadd.f32 %v329, %v348
    %v352 = vadd.f32 %v330, %v349
    %v353 = vadd.f32 %v331, %v350
    %v354 = vld [vmem:[#allocation2] sm:$0xff]
    %v355 = vld [vmem:[#allocation2 + $0x8] sm:$0xff]
    %v356 = vld [vmem:[#allocation2 + $0x10] sm:$0xf]
    %v357 = vadd.f32 %v354, %v351
    %v358 = vadd.f32 %v355, %v352
    %v359 = vadd.f32 %v356, %v353
    %vm360 = vcmask 64512
    %361 = vst.msk [vmem:[#allocation2] sm:$0xff] %vm360, %v357
    %362 = vst.msk [vmem:[#allocation2 + $0x8] sm:$0xff] %vm360, %v358
    %vm363 = vcmask 60416
    %364 = vst.msk [vmem:[#allocation2 + $0x10] sm:$0xf] %vm363, %v359
    // Predicated region
    $region22: #{tpu_custom_call.1} parent=1 // pred_check
      %p365 = pneg %p114
    $region23: #{tpu_custom_call.1} parent=1 // pred_check_branch
      %367 = sbr.rel (%p365) target = $region25
    $region24: #{tpu_custom_call.1} parent=1 // pred_region
      %v368 = vld [vmem:[#allocation2] sm:$0xff]
      %v369 = vld [vmem:[#allocation2 + $0x8] sm:$0xff]
      %v370 = vld [vmem:[#allocation2 + $0x10] sm:$0xf]
      %v371 = vsel %vm360, %v368, 0.0
      %v372 = vsel %vm360, %v369, 0.0
      %v373 = vadd.f32 %v371, %v372
      %v374 = vsel %vm363, %v370, 0.0
      %v375 = vadd.f32 %v373, %v374
      %v376 = vrot.slane %v375, 4
      %v377 = vadd.f32 %v375, %v376
      %v378 = vrot.slane %v377, 2
      %v379 = vadd.f32 %v377, %v378
      %v380 = vrot.slane %v379, 1
      %v381 = vadd.f32 %v379, %v380
      %vm382 = vcmask 57344
      %383 = vst.msk [vmem:[#allocation3] sm:$0x1] %vm382, %v381
    $region25: #{tpu_custom_call.1} parent=1 // pred_fallthru
      _
    // Predicated region
    $region26: #{tpu_custom_call.1} parent=1 // pred_check
      _
    $region27: #{tpu_custom_call.1} parent=1 // pred_check_branch
      %385 = sbr.rel (0) target = $region29
    $region28: #{tpu_custom_call.1} parent=1 // pred_region
      %387 = vsyncadd [#allocation4], 0
      %s389 = sshll.u32 [#allocation3], 4
      %s390 = int_to_ptr.vmem [resolvable:$true] %s389
      %s391 = sshll.u32 %s4, 4
      %s392 = int_to_ptr.hbm [resolvable:$true] %s391
      %394 = dma.vmem_to_hbm [thread:$0]  %s390, 16, %s392, [#allocation4]
    $region29: #{tpu_custom_call.1} parent=1 // pred_fallthru
      _
    // Predicated region
    $region30: #{tpu_custom_call.1} parent=1 // pred_check
      _
    $region31: #{tpu_custom_call.1} parent=1 // pred_check_branch
      %396 = sbr.rel (0) target = $region33
    $region32: #{tpu_custom_call.1} parent=1 // pred_region
      %398 = dma.done [#allocation4], 16
    $region33: #{tpu_custom_call.1} parent=1 // pred_fallthru
      _
    %399 = vsyncpa [#allocation4], 1

</llo_original>
